<compile_context>
chip_gen: v6e
topology: v6e:2x2x1
jax: 0.10.0
libtpu: 0.0.40
codegen_flags: <defaults>
</compile_context>

<pallas_src>
import jax
import jax.numpy as jnp
from jax import lax
from jax.experimental import pallas as pl
from jax.experimental.pallas import tpu as pltpu


def _round_up(x, m):
    return ((x + m - 1) // m) * m


def conjugate_karatsuba_kernel(xr_ref, xi_ref, ar_ref, asum_ref, adiff_ref,
                               yr_ref, yi_ref):
    """y = x @ A with A = conj(W)^T, via the 3-multiply complex product.

    xr_ref, xi_ref : [tile_m, N]      input row tiles (VMEM)
    ar_ref         : [N, tile_n]      Ar      = Wr^T
    asum_ref       : [N, tile_n]      Ar + Ai = (Wr - Wi)^T
    adiff_ref      : [N, tile_n]      Ai - Ar = -(Wr + Wi)^T
    yr_ref, yi_ref : [tile_m, tile_n] output tiles (VMEM)
    """
    xr = xr_ref[...]
    xi = xi_ref[...]
    # Plain last-dim/first-dim contraction -> native MXU layout, no transpose.
    k1 = jnp.dot(xr + xi, ar_ref[...], preferred_element_type=jnp.float32)
    # Finish yr before starting yi so only k1 stays live across both halves.
    k3 = jnp.dot(xi, asum_ref[...], preferred_element_type=jnp.float32)
    yr_ref[...] = (k1 - k3).astype(yr_ref.dtype)
    k2 = jnp.dot(xr, adiff_ref[...], preferred_element_type=jnp.float32)
    yi_ref[...] = (k1 + k2).astype(yi_ref.dtype)


def conjugate_linear_operator_forward(x, W, *, use_bf16_operands=False,
                                      return_split=False):
    """ConjugateLinearOperator(base).forward(x), base: z -> z @ W^T per row.

    x : complex64 [batch, channels, N]
    W : complex64 [N, N]
    returns complex64 [batch, channels, N] = conj(base.forward(conj(x)))
            (or (real, imag) f32 planes if return_split=True)
    """
    B, C, N = x.shape
    M = B * C

    op_dtype = jnp.bfloat16 if use_bf16_operands else jnp.float32
    bpe = 2 if use_bf16_operands else 4
    sub = 16 if use_bf16_operands else 8     # sublane multiple for row tiles

    # --- glue: complex -> real planes (one-time, grid-invariant for W) ------
    wr = jnp.real(W).astype(jnp.float32)
    wi = jnp.imag(W).astype(jnp.float32)
    # A = conj(W)^T -> Ar = Wr^T, Ai = -Wi^T.  Pre-transposed ONCE here so the
    # kernel's dot needs no per-step weight transpose.
    a_r = wr.T.astype(op_dtype)              # Ar
    a_sum = (wr - wi).T.astype(op_dtype)     # Ar + Ai
    a_diff = (-(wr + wi)).T.astype(op_dtype)  # Ai - Ar

    xr = jnp.real(x).reshape(M, N).astype(op_dtype)
    xi = jnp.imag(x).reshape(M, N).astype(op_dtype)

    # --- per-generation VMEM budget -----------------------------------------
    try:
        vmem_cap = int(pltpu.get_tpu_info().vmem_capacity_bytes)
    except Exception:
        vmem_cap = 64 * 2**20                # conservative: v7x per-TC VMEM
    usable = int(0.80 * vmem_cap)            # leave DMA/scratch headroom

    # Output-column tiling only when 3 resident f32/bf16 [N,N] planes would
    # eat too much VMEM; otherwise keep weights resident + single-buffered.
    w_full = 3 * N * N * bpe
    if w_full <= usable // 2:
        tile_n = N
    else:
        tile_n = min(N, 512)                 # multiple of 128
    n_col = pl.cdiv(N, tile_n)
    w_bytes = w_full if n_col == 1 else 3 * 2 * N * tile_n * bpe

    # Row tile: largest candidate whose pipelined inputs/outputs plus live
    # matmul intermediates fit the remaining budget.
    def _row_cost(tm):
        return (2 * 2 * tm * N * bpe          # xr, xi double-buffered
                + 2 * 2 * tm * tile_n * 4     # yr, yi double-buffered
                + 3 * tm * tile_n * 4)        # k1/k2/k3 intermediates

    tile_m = sub
    for cand in (1024, 512, 256, 128, 64, 32, 16, 8):
        if cand % sub:
            continue
        if w_bytes + _row_cost(cand) <= usable:
            tile_m = cand
            break
    tile_m = min(tile_m, _round_up(M, sub))
    # Megacore: make sure the row grid has >=2 steps when M allows, so both
    # v7x TensorCores get work (harmless no-op on single-TC v5e/v6e).
    if pl.cdiv(M, tile_m) < 2 and M > sub:
        tile_m = _round_up(pl.cdiv(M, 2), sub)
    n_row = pl.cdiv(M, tile_m)

    grid = (n_row, n_col)

    x_spec = pl.BlockSpec((tile_m, N), lambda i, j: (i, 0))
    # Grid-invariant weights (single column block) -> single-buffer to halve
    # their VMEM footprint; streamed column blocks use default double-buffer.
    w_mode = pl.Buffered(1) if n_col == 1 else None
    w_spec = pl.BlockSpec((N, tile_n), lambda i, j: (0, j),
                          pipeline_mode=w_mode)
    y_spec = pl.BlockSpec((tile_m, tile_n), lambda i, j: (i, j))

    vmem_limit = int(min(usable, w_bytes + _row_cost(tile_m) + (8 << 20)))

    cost = pl.CostEstimate(
        flops=3 * 2 * M * N * N,                                  # 3 matmuls
        bytes_accessed=(2 * M * N * bpe + 2 * M * N * 4
                        + 3 * N * N * bpe * (1 if n_col == 1 else n_row)),
        transcendentals=0,
    )

    yr, yi = pl.pallas_call(
        conjugate_karatsuba_kernel,
        out_shape=(jax.ShapeDtypeStruct((M, N), jnp.float32),
                   jax.ShapeDtypeStruct((M, N), jnp.float32)),
        grid=grid,
        in_specs=[x_spec, x_spec, w_spec, w_spec, w_spec],
        out_specs=(y_spec, y_spec),
        compiler_params=pltpu.CompilerParams(
            dimension_semantics=("parallel", "parallel"),
            vmem_limit_bytes=vmem_limit),
        cost_estimate=cost,
    )(xr, xi, a_r, a_sum, a_diff)

    if return_split:
        return yr.reshape(B, C, N), yi.reshape(B, C, N)
    return lax.complex(yr, yi).reshape(B, C, N).astype(x.dtype)


if __name__ == "__main__":
    # Small deterministic setup: batch=2, channels=4, feature dim 128.
    B, C, N = 2, 4, 128

    key = jax.random.PRNGKey(0)
    kxr, kxi, kwr, kwi = jax.random.split(key, 4)
    x = (jax.random.normal(kxr, (B, C, N), dtype=jnp.float32)
         + 1j * jax.random.normal(kxi, (B, C, N), dtype=jnp.float32)
         ).astype(jnp.complex64)
    W = ((jax.random.normal(kwr, (N, N), dtype=jnp.float32)
          + 1j * jax.random.normal(kwi, (N, N), dtype=jnp.float32)) * 0.05
         ).astype(jnp.complex64)

    out = conjugate_linear_operator_forward(x, W)
    out = jax.block_until_ready(out)

    # Pure-JAX reference of ConjugateLinearOperator.forward:
    #   base.forward(z) = z @ W^T ; forward(x) = conj(base.forward(conj(x)))
    ref = jnp.conjugate(jnp.conjugate(x) @ W.T)

    assert out.shape == (B, C, N)
    assert jnp.allclose(out, ref, atol=1e-4, rtol=1e-4), "mismatch vs reference"

    print("KERNEL_OK")
</pallas_src>

<mosaic_0001>
module attributes {stable_mosaic.version = 11 : i64} {
  func.func @conjugate_karatsuba_kernel(%arg0: i32, %arg1: i32, %arg2: memref<8x128xf32, #tpu.memory_space<vmem>>, %arg3: memref<8x128xf32, #tpu.memory_space<vmem>>, %arg4: memref<128x128xf32, #tpu.memory_space<vmem>>, %arg5: memref<128x128xf32, #tpu.memory_space<vmem>>, %arg6: memref<128x128xf32, #tpu.memory_space<vmem>>, %arg7: memref<8x128xf32, #tpu.memory_space<vmem>>, %arg8: memref<8x128xf32, #tpu.memory_space<vmem>>) attributes {dimension_semantics = [#tpu.dimension_semantics<parallel>, #tpu.dimension_semantics<parallel>], iteration_bounds = array<i64: 1, 1>, scalar_prefetch = 0 : i64, scratch_operands = 0 : i64, tpu.core_type = #tpu.core_type<tc>, window_params = [{transform_indices = @transform_0, window_bounds = array<i64: 8, 128>}, {transform_indices = @transform_1, window_bounds = array<i64: 8, 128>}, {pipeline_mode = #tpu.pipeline_mode<synchronous>, transform_indices = @transform_2, window_bounds = array<i64: 128, 128>}, {pipeline_mode = #tpu.pipeline_mode<synchronous>, transform_indices = @transform_3, window_bounds = array<i64: 128, 128>}, {pipeline_mode = #tpu.pipeline_mode<synchronous>, transform_indices = @transform_4, window_bounds = array<i64: 128, 128>}, {transform_indices = @transform_5, window_bounds = array<i64: 8, 128>}, {transform_indices = @transform_6, window_bounds = array<i64: 8, 128>}]} {
    %c0 = arith.constant 0 : index
    %c0_0 = arith.constant 0 : index
    %0 = vector.load %arg2[%c0, %c0_0] : memref<8x128xf32, #tpu.memory_space<vmem>>, vector<8x128xf32>
    %c0_1 = arith.constant 0 : index
    %c0_2 = arith.constant 0 : index
    %1 = vector.load %arg3[%c0_1, %c0_2] : memref<8x128xf32, #tpu.memory_space<vmem>>, vector<8x128xf32>
    %2 = arith.addf %0, %1 : vector<8x128xf32>
    %c0_3 = arith.constant 0 : index
    %c0_4 = arith.constant 0 : index
    %3 = vector.load %arg4[%c0_3, %c0_4] : memref<128x128xf32, #tpu.memory_space<vmem>>, vector<128x128xf32>
    %cst = arith.constant dense<0.000000e+00> : vector<8x128xf32>
    %4 = tpu.matmul %2, %3, %cst {dimension_numbers = #tpu.dot_dimension_numbers<[1], [0], [0], [1], [0, 0, 1, 1], [], []>} : vector<8x128xf32>, vector<128x128xf32>, vector<8x128xf32> -> vector<8x128xf32>
    %c0_5 = arith.constant 0 : index
    %c0_6 = arith.constant 0 : index
    %5 = vector.load %arg5[%c0_5, %c0_6] : memref<128x128xf32, #tpu.memory_space<vmem>>, vector<128x128xf32>
    %cst_7 = arith.constant dense<0.000000e+00> : vector<8x128xf32>
    %6 = tpu.matmul %1, %5, %cst_7 {dimension_numbers = #tpu.dot_dimension_numbers<[1], [0], [0], [1], [0, 0, 1, 1], [], []>} : vector<8x128xf32>, vector<128x128xf32>, vector<8x128xf32> -> vector<8x128xf32>
    %7 = arith.subf %4, %6 : vector<8x128xf32>
    %c0_8 = arith.constant 0 : index
    %c0_9 = arith.constant 0 : index
    %8 = vector.load %arg7[%c0_8, %c0_9] : memref<8x128xf32, #tpu.memory_space<vmem>>, vector<8x128xf32>
    tpu.vector_store %arg7[%c0_8, %c0_9], %7 {strides = array<i32>} : memref<8x128xf32, #tpu.memory_space<vmem>>, vector<8x128xf32>,
    %c0_10 = arith.constant 0 : index
    %c0_11 = arith.constant 0 : index
    %9 = vector.load %arg6[%c0_10, %c0_11] : memref<128x128xf32, #tpu.memory_space<vmem>>, vector<128x128xf32>
    %cst_12 = arith.constant dense<0.000000e+00> : vector<8x128xf32>
    %10 = tpu.matmul %0, %9, %cst_12 {dimension_numbers = #tpu.dot_dimension_numbers<[1], [0], [0], [1], [0, 0, 1, 1], [], []>} : vector<8x128xf32>, vector<128x128xf32>, vector<8x128xf32> -> vector<8x128xf32>
    %11 = arith.addf %4, %10 : vector<8x128xf32>
    %c0_13 = arith.constant 0 : index
    %c0_14 = arith.constant 0 : index
    %12 = vector.load %arg8[%c0_13, %c0_14] : memref<8x128xf32, #tpu.memory_space<vmem>>, vector<8x128xf32>
    tpu.vector_store %arg8[%c0_13, %c0_14], %11 {strides = array<i32>} : memref<8x128xf32, #tpu.memory_space<vmem>>, vector<8x128xf32>,
    return
  }
  func.func @transform_0(%arg0: i32, %arg1: i32) -> (i32, i32) {
    %c0_i32 = arith.constant 0 : i32
    %c0_i32_0 = arith.constant 0 : i32
    return %arg0, %c0_i32 : i32, i32
  }
  func.func @transform_1(%arg0: i32, %arg1: i32) -> (i32, i32) {
    %c0_i32 = arith.constant 0 : i32
    %c0_i32_0 = arith.constant 0 : i32
    return %arg0, %c0_i32 : i32, i32
  }
  func.func @transform_2(%arg0: i32, %arg1: i32) -> (i32, i32) {
    %c0_i32 = arith.constant 0 : i32
    %c0_i32_0 = arith.constant 0 : i32
    return %c0_i32, %arg1 : i32, i32
  }
  func.func @transform_3(%arg0: i32, %arg1: i32) -> (i32, i32) {
    %c0_i32 = arith.constant 0 : i32
    %c0_i32_0 = arith.constant 0 : i32
    return %c0_i32, %arg1 : i32, i32
  }
  func.func @transform_4(%arg0: i32, %arg1: i32) -> (i32, i32) {
    %c0_i32 = arith.constant 0 : i32
    %c0_i32_0 = arith.constant 0 : i32
    return %c0_i32, %arg1 : i32, i32
  }
  func.func @transform_5(%arg0: i32, %arg1: i32) -> (i32, i32) {
    %c0_i32 = arith.constant 0 : i32
    return %arg0, %arg1 : i32, i32
  }
  func.func @transform_6(%arg0: i32, %arg1: i32) -> (i32, i32) {
    %c0_i32 = arith.constant 0 : i32
    return %arg0, %arg1 : i32, i32
  }
}

</mosaic_0001>

<llo_original>
// kernel: tpu_custom_call.1
$region0: #{tpu_custom_call.1}
  #allocation0 [shape = 'u32[]', space=smem, size = 0x4, offset = 0x4, fixed_abs, tag = 'smem constant byte address 0x4 - core index']
  #allocation1 [shape = 'u32[144,128]{1,0:T(1,128)}', space=vmem, size = 0x12000, scoped, tag = 'internal scratch']
  %s0 = inlined_call_operand.hbm [shape: f32[8,128], index: 0, kind: input, shape index: {}]
  %s1 = inlined_call_operand.hbm [shape: f32[8,128], index: 1, kind: input, shape index: {}]
  %s2 = inlined_call_operand.hbm [shape: f32[128,128], index: 2, kind: input, shape index: {}]
  %s3 = inlined_call_operand.hbm [shape: f32[128,128], index: 3, kind: input, shape index: {}]
  %s4 = inlined_call_operand.hbm [shape: f32[128,128], index: 4, kind: input, shape index: {}]
  %s5 = inlined_call_operand.hbm [shape: f32[8,128], index: 5, kind: output, shape index: {0}]
  %s6 = inlined_call_operand.hbm [shape: f32[8,128], index: 6, kind: output, shape index: {1}]
  %7 = xla_tuple %s5, %s6
  %s8 = sld [smem:[#allocation0]]
  $region58: #{tpu_custom_call.1} parent=0
    _
  %s10 = ssub.s32 1, %s8
  %s11 = scalar_select 0, %s10, %s8
  $region1: #{tpu_custom_call.1} parent=0
    #allocation2 [shape = 'u8[4096]{0}', space=vmem, size = 0x1000, scoped, tag = 'input window, operand 0, single buffered']
    #allocation3 [shape = 's32[1]{0}', space=sflag, size = 0x4, scoped, tag = 'scoped memory for tpu_custom_call.1']
    #allocation4 [shape = 's32[1]{0}', space=sflag, size = 0x4, scoped, tag = 'scoped memory for tpu_custom_call.1']
    #allocation5 [shape = 'u8[4096]{0}', space=vmem, size = 0x1000, scoped, tag = 'input window, operand 1, single buffered']
    #allocation6 [shape = 's32[1]{0}', space=sflag, size = 0x4, scoped, tag = 'scoped memory for tpu_custom_call.1']
    #allocation7 [shape = 'u8[65536]{0}', space=vmem, size = 0x10000, scoped, tag = 'input window, operand 2, single buffered']
    #allocation8 [shape = 'u8[65536]{0}', space=vmem, size = 0x10000, scoped, tag = 'input window, operand 3, single buffered']
    #allocation9 [shape = 's32[1]{0}', space=sflag, size = 0x4, scoped, tag = 'scoped memory for tpu_custom_call.1']
    #allocation10 [shape = 'u8[65536]{0}', space=vmem, size = 0x10000, scoped, tag = 'input window, operand 4, single buffered']
    #allocation11 [shape = 'u8[4096]{0}', space=vmem, size = 0x1000, scoped, tag = 'output window, operand 0, single buffered']
    #allocation12 [shape = 'u8[4096]{0}', space=vmem, size = 0x1000, scoped, tag = 'output window, operand 1, single buffered']
    #allocation13 [shape = 's32[1]{0}', space=sflag, size = 0x4, scoped, tag = 'scoped memory for tpu_custom_call.1']
    %12 = vsyncpa [#allocation3], 0
    %13 = vsyncpa [#allocation6], 0
    %14 = vsyncpa [#allocation9], 0
    %15 = vsyncpa [#allocation4], 0
    %16 = vsyncpa [#allocation13], 0
    // Predicated region
    $region2: #{tpu_custom_call.1} parent=1 // pred_check
      _
    $region3: #{tpu_custom_call.1} parent=1 // pred_check_branch
      %18 = sbr.rel (0) target = $region5
    $region4: #{tpu_custom_call.1} parent=1 // pred_region
      %s20 = ssub.s32 128, 128
      %21 = vsyncadd [#allocation3], %s20
      %s23 = sshll.u32 [#allocation2], 4
      %s24 = int_to_ptr.vmem [resolvable:$true] %s23
      %26 = dma.hbm_to_vmem [thread:$0]  %s0, 128, %s24, [#allocation3]
    $region5: #{tpu_custom_call.1} parent=1 // pred_fallthru
      _
    // Predicated region
    $region6: #{tpu_custom_call.1} parent=1 // pred_check
      _
    $region7: #{tpu_custom_call.1} parent=1 // pred_check_branch
      %28 = sbr.rel (0) target = $region9
    $region8: #{tpu_custom_call.1} parent=1 // pred_region
      %s30 = ssub.s32 128, 128
      %31 = vsyncadd [#allocation6], %s30
      %s33 = sshll.u32 [#allocation5], 4
      %s34 = int_to_ptr.vmem [resolvable:$true] %s33
      %36 = dma.hbm_to_vmem [thread:$0]  %s1, 128, %s34, [#allocation6]
    $region9: #{tpu_custom_call.1} parent=1 // pred_fallthru
      _
    // Predicated region
    $region10: #{tpu_custom_call.1} parent=1 // pred_check
      _
    $region11: #{tpu_custom_call.1} parent=1 // pred_check_branch
      %38 = sbr.rel (0) target = $region13
    $region12: #{tpu_custom_call.1} parent=1 // pred_region
      %s40 = ssub.s32 2048, 2048
      %41 = vsyncadd [#allocation6], %s40
      %s42 = sshll.u32 [#allocation7], 4
      %s43 = int_to_ptr.vmem [resolvable:$true] %s42
      %48 = dma.hbm_to_vmem [thread:$0]  %s2, 2048, %s43, [#allocation6], 128, 128, 8
    $region13: #{tpu_custom_call.1} parent=1 // pred_fallthru
      _
    // Predicated region
    $region14: #{tpu_custom_call.1} parent=1 // pred_check
      _
    $region15: #{tpu_custom_call.1} parent=1 // pred_check_branch
      %50 = sbr.rel (0) target = $region17
    $region16: #{tpu_custom_call.1} parent=1 // pred_region
      %s52 = ssub.s32 2048, 2048
      %53 = vsyncadd [#allocation9], %s52
      %s54 = sshll.u32 [#allocation8], 4
      %s55 = int_to_ptr.vmem [resolvable:$true] %s54
      %60 = dma.hbm_to_vmem [thread:$0]  %s3, 2048, %s55, [#allocation9], 128, 128, 8
    $region17: #{tpu_custom_call.1} parent=1 // pred_fallthru
      _
    // Predicated region
    $region18: #{tpu_custom_call.1} parent=1 // pred_check
      _
    $region19: #{tpu_custom_call.1} parent=1 // pred_check_branch
      %62 = sbr.rel (0) target = $region21
    $region20: #{tpu_custom_call.1} parent=1 // pred_region
      %s64 = ssub.s32 2048, 2048
      %65 = vsyncadd [#allocation9], %s64
      %s66 = sshll.u32 [#allocation10], 4
      %s67 = int_to_ptr.vmem [resolvable:$true] %s66
      %72 = dma.hbm_to_vmem [thread:$0]  %s4, 2048, %s67, [#allocation9], 128, 128, 8
    $region21: #{tpu_custom_call.1} parent=1 // pred_fallthru
      _
    // Predicated region
    $region22: #{tpu_custom_call.1} parent=1 // pred_check
      _
    $region23: #{tpu_custom_call.1} parent=1 // pred_check_branch
      %74 = sbr.rel (0) target = $region25
    $region24: #{tpu_custom_call.1} parent=1 // pred_region
      %75 = dma.done [#allocation3], 128
    $region25: #{tpu_custom_call.1} parent=1 // pred_fallthru
      _
    // Predicated region
    $region26: #{tpu_custom_call.1} parent=1 // pred_check
      _
    $region27: #{tpu_custom_call.1} parent=1 // pred_check_branch
      %77 = sbr.rel (0) target = $region29
    $region28: #{tpu_custom_call.1} parent=1 // pred_region
      %78 = dma.done [#allocation6], 128
    $region29: #{tpu_custom_call.1} parent=1 // pred_fallthru
      _
    // Predicated region
    $region30: #{tpu_custom_call.1} parent=1 // pred_check
      _
    $region31: #{tpu_custom_call.1} parent=1 // pred_check_branch
      %80 = sbr.rel (0) target = $region33
    $region32: #{tpu_custom_call.1} parent=1 // pred_region
      %81 = dma.done [#allocation6], 2048
    $region33: #{tpu_custom_call.1} parent=1 // pred_fallthru
      _
    // Predicated region
    $region34: #{tpu_custom_call.1} parent=1 // pred_check
      _
    $region35: #{tpu_custom_call.1} parent=1 // pred_check_branch
      %83 = sbr.rel (0) target = $region37
    $region36: #{tpu_custom_call.1} parent=1 // pred_region
      %84 = dma.done [#allocation9], 2048
    $region37: #{tpu_custom_call.1} parent=1 // pred_fallthru
      _
    // Predicated region
    $region38: #{tpu_custom_call.1} parent=1 // pred_check
      _
    $region39: #{tpu_custom_call.1} parent=1 // pred_check_branch
      %86 = sbr.rel (0) target = $region41
    $region40: #{tpu_custom_call.1} parent=1 // pred_region
      %87 = dma.done [#allocation9], 2048
    $region41: #{tpu_custom_call.1} parent=1 // pred_fallthru
      _
    %v88 = vld [vmem:[#allocation2] sm:$0xff]
    %v89 = vld [vmem:[#allocation5] sm:$0xff]
    %v90 = vadd.f32 %v88, %v89
    %v91 = vld [vmem:[#allocation7] sm:$0xff]
    %v92 = vld [vmem:[#allocation7 + $0x8] sm:$0xff]
    %v93 = vld [vmem:[#allocation7 + $0x10] sm:$0xff]
    %v94 = vld [vmem:[#allocation7 + $0x18] sm:$0xff]
    %v95 = vld [vmem:[#allocation7 + $0x20] sm:$0xff]
    %v96 = vld [vmem:[#allocation7 + $0x28] sm:$0xff]
    %v97 = vld [vmem:[#allocation7 + $0x30] sm:$0xff]
    %v98 = vld [vmem:[#allocation7 + $0x38] sm:$0xff]
    %v99 = vld [vmem:[#allocation7 + $0x40] sm:$0xff]
    %v100 = vld [vmem:[#allocation7 + $0x48] sm:$0xff]
    %v101 = vld [vmem:[#allocation7 + $0x50] sm:$0xff]
    %v102 = vld [vmem:[#allocation7 + $0x58] sm:$0xff]
    %v103 = vld [vmem:[#allocation7 + $0x60] sm:$0xff]
    %v104 = vld [vmem:[#allocation7 + $0x68] sm:$0xff]
    %v105 = vld [vmem:[#allocation7 + $0x70] sm:$0xff]
    %v106 = vld [vmem:[#allocation7 + $0x78] sm:$0xff]
    %107 = vmatprep.subr.mxu0 0.0
    %108 = vmatpush1.msra.mxu0 %v106
    %109 = vmatprep.subr.mxu0 0.0
    %110 = vmatpush1.msra.mxu0 %v105
    %111 = vmatprep.subr.mxu0 0.0
    %112 = vmatpush1.msra.mxu0 %v104
    %113 = vmatprep.subr.mxu0 0.0
    %114 = vmatpush1.msra.mxu0 %v103
    %115 = vmatprep.subr.mxu0 0.0
    %116 = vmatpush1.msra.mxu0 %v102
    %117 = vmatprep.subr.mxu0 0.0
    %118 = vmatpush1.msra.mxu0 %v101
    %119 = vmatprep.subr.mxu0 0.0
    %120 = vmatpush1.msra.mxu0 %v100
    %121 = vmatprep.subr.mxu0 0.0
    %122 = vmatpush1.msra.mxu0 %v99
    %123 = vmatprep.subr.mxu0 0.0
    %124 = vmatpush1.msra.mxu0 %v98
    %125 = vmatprep.subr.mxu0 0.0
    %126 = vmatpush1.msra.mxu0 %v97
    %127 = vmatprep.subr.mxu0 0.0
    %128 = vmatpush1.msra.mxu0 %v96
    %129 = vmatprep.subr.mxu0 0.0
    %130 = vmatpush1.msra.mxu0 %v95
    %131 = vmatprep.subr.mxu0 0.0
    %132 = vmatpush1.msra.mxu0 %v94
    %133 = vmatprep.subr.mxu0 0.0
    %134 = vmatpush1.msra.mxu0 %v93
    %135 = vmatprep.subr.mxu0 0.0
    %136 = vmatpush1.msra.mxu0 %v92
    %137 = vmatprep.subr.mxu0 0.0
    %138 = vmatpush1.msra.mxu0 %v91
    %139 = vmatprep.subr.mxu0 0.0
    %140 = vmatpush2.msra.mxu0 0.0
    %141 = vmatprep.subr.mxu0 0.0
    %142 = vmatpush2.msra.mxu0 0.0
    %143 = vmatprep.subr.mxu0 0.0
    %144 = vmatpush2.msra.mxu0 0.0
    %145 = vmatprep.subr.mxu0 0.0
    %146 = vmatpush2.msra.mxu0 0.0
    %147 = vmatprep.subr.mxu0 0.0
    %148 = vmatpush2.msra.mxu0 0.0
    %149 = vmatprep.subr.mxu0 0.0
    %150 = vmatpush2.msra.mxu0 0.0
    %151 = vmatprep.subr.mxu0 0.0
    %152 = vmatpush2.msra.mxu0 0.0
    %153 = vmatprep.subr.mxu0 0.0
    %154 = vmatpush2.msra.mxu0 0.0
    %155 = vmatprep.subr.mxu0 0.0
    %156 = vmatpush2.msra.mxu0 0.0
    %157 = vmatprep.subr.mxu0 0.0
    %158 = vmatpush2.msra.mxu0 0.0
    %159 = vmatprep.subr.mxu0 0.0
    %160 = vmatpush2.msra.mxu0 0.0
    %161 = vmatprep.subr.mxu0 0.0
    %162 = vmatpush2.msra.mxu0 0.0
    %163 = vmatprep.subr.mxu0 0.0
    %164 = vmatpush2.msra.mxu0 0.0
    %165 = vmatprep.subr.mxu0 0.0
    %166 = vmatpush2.msra.mxu0 0.0
    %167 = vmatprep.subr.mxu0 0.0
    %168 = vmatpush2.msra.mxu0 0.0
    %169 = vmatprep.subr.mxu0 0.0
    %170 = vmatpush2.msra.mxu0 0.0
    %171 = vmatprep.mubr.f32.mxu0 0.0
    %172 = vmatmul.mubr.f32.gmra.mxu0 %v90
    %v173 = vpop.f32.mrf.mxu0
    %v174 = vadd.f32 0.0, %v173
    %v175 = vpop.f32.mrf.mxu0
    %176 = vdwg.mxu0
    %v177 = vld [vmem:[#allocation8] sm:$0xff]
    %v178 = vld [vmem:[#allocation8 + $0x8] sm:$0xff]
    %v179 = vld [vmem:[#allocation8 + $0x10] sm:$0xff]
    %v180 = vld [vmem:[#allocation8 + $0x18] sm:$0xff]
    %v181 = vld [vmem:[#allocation8 + $0x20] sm:$0xff]
    %v182 = vld [vmem:[#allocation8 + $0x28] sm:$0xff]
    %v183 = vld [vmem:[#allocation8 + $0x30] sm:$0xff]
    %v184 = vld [vmem:[#allocation8 + $0x38] sm:$0xff]
    %v185 = vld [vmem:[#allocation8 + $0x40] sm:$0xff]
    %v186 = vld [vmem:[#allocation8 + $0x48] sm:$0xff]
    %v187 = vld [vmem:[#allocation8 + $0x50] sm:$0xff]
    %v188 = vld [vmem:[#allocation8 + $0x58] sm:$0xff]
    %v189 = vld [vmem:[#allocation8 + $0x60] sm:$0xff]
    %v190 = vld [vmem:[#allocation8 + $0x68] sm:$0xff]
    %v191 = vld [vmem:[#allocation8 + $0x70] sm:$0xff]
    %v192 = vld [vmem:[#allocation8 + $0x78] sm:$0xff]
    %193 = vmatprep.subr.mxu0 0.0
    %194 = vmatpush1.msra.mxu0 %v192
    %195 = vmatprep.subr.mxu0 0.0
    %196 = vmatpush1.msra.mxu0 %v191
    %197 = vmatprep.subr.mxu0 0.0
    %198 = vmatpush1.msra.mxu0 %v190
    %199 = vmatprep.subr.mxu0 0.0
    %200 = vmatpush1.msra.mxu0 %v189
    %201 = vmatprep.subr.mxu0 0.0
    %202 = vmatpush1.msra.mxu0 %v188
    %203 = vmatprep.subr.mxu0 0.0
    %204 = vmatpush1.msra.mxu0 %v187
    %205 = vmatprep.subr.mxu0 0.0
    %206 = vmatpush1.msra.mxu0 %v186
    %207 = vmatprep.subr.mxu0 0.0
    %208 = vmatpush1.msra.mxu0 %v185
    %209 = vmatprep.subr.mxu0 0.0
    %210 = vmatpush1.msra.mxu0 %v184
    %211 = vmatprep.subr.mxu0 0.0
    %212 = vmatpush1.msra.mxu0 %v183
    %213 = vmatprep.subr.mxu0 0.0
    %214 = vmatpush1.msra.mxu0 %v182
    %215 = vmatprep.subr.mxu0 0.0
    %216 = vmatpush1.msra.mxu0 %v181
    %217 = vmatprep.subr.mxu0 0.0
    %218 = vmatpush1.msra.mxu0 %v180
    %219 = vmatprep.subr.mxu0 0.0
    %220 = vmatpush1.msra.mxu0 %v179
    %221 = vmatprep.subr.mxu0 0.0
    %222 = vmatpush1.msra.mxu0 %v178
    %223 = vmatprep.subr.mxu0 0.0
    %224 = vmatpush1.msra.mxu0 %v177
    %225 = vmatprep.subr.mxu0 0.0
    %226 = vmatpush2.msra.mxu0 0.0
    %227 = vmatprep.subr.mxu0 0.0
    %228 = vmatpush2.msra.mxu0 0.0
    %229 = vmatprep.subr.mxu0 0.0
    %230 = vmatpush2.msra.mxu0 0.0
    %231 = vmatprep.subr.mxu0 0.0
    %232 = vmatpush2.msra.mxu0 0.0
    %233 = vmatprep.subr.mxu0 0.0
    %234 = vmatpush2.msra.mxu0 0.0
    %235 = vmatprep.subr.mxu0 0.0
    %236 = vmatpush2.msra.mxu0 0.0
    %237 = vmatprep.subr.mxu0 0.0
    %238 = vmatpush2.msra.mxu0 0.0
    %239 = vmatprep.subr.mxu0 0.0
    %240 = vmatpush2.msra.mxu0 0.0
    %241 = vmatprep.subr.mxu0 0.0
    %242 = vmatpush2.msra.mxu0 0.0
    %243 = vmatprep.subr.mxu0 0.0
    %244 = vmatpush2.msra.mxu0 0.0
    %245 = vmatprep.subr.mxu0 0.0
    %246 = vmatpush2.msra.mxu0 0.0
    %247 = vmatprep.subr.mxu0 0.0
    %248 = vmatpush2.msra.mxu0 0.0
    %249 = vmatprep.subr.mxu0 0.0
    %250 = vmatpush2.msra.mxu0 0.0
    %251 = vmatprep.subr.mxu0 0.0
    %252 = vmatpush2.msra.mxu0 0.0
    %253 = vmatprep.subr.mxu0 0.0
    %254 = vmatpush2.msra.mxu0 0.0
    %255 = vmatprep.subr.mxu0 0.0
    %256 = vmatpush2.msra.mxu0 0.0
    %257 = vmatprep.mubr.f32.mxu0 0.0
    %258 = vmatmul.mubr.f32.gmra.mxu0 %v89
    %v259 = vpop.f32.mrf.mxu0
    %v260 = vadd.f32 0.0, %v259
    %v261 = vpop.f32.mrf.mxu0
    %262 = vdwg.mxu0
    %v263 = vsub.f32 %v174, %v260
    %264 = vst [vmem:[#allocation11] sm:$0xff] %v263
    %v265 = vld [vmem:[#allocation10] sm:$0xff]
    %v266 = vld [vmem:[#allocation10 + $0x8] sm:$0xff]
    %v267 = vld [vmem:[#allocation10 + $0x10] sm:$0xff]
    %v268 = vld [vmem:[#allocation10 + $0x18] sm:$0xff]
    %v269 = vld [vmem:[#allocation10 + $0x20] sm:$0xff]
    %v270 = vld [vmem:[#allocation10 + $0x28] sm:$0xff]
    %v271 = vld [vmem:[#allocation10 + $0x30] sm:$0xff]
    %v272 = vld [vmem:[#allocation10 + $0x38] sm:$0xff]
    %v273 = vld [vmem:[#allocation10 + $0x40] sm:$0xff]
    %v274 = vld [vmem:[#allocation10 + $0x48] sm:$0xff]
    %v275 = vld [vmem:[#allocation10 + $0x50] sm:$0xff]
    %v276 = vld [vmem:[#allocation10 + $0x58] sm:$0xff]
    %v277 = vld [vmem:[#allocation10 + $0x60] sm:$0xff]
    %v278 = vld [vmem:[#allocation10 + $0x68] sm:$0xff]
    %v279 = vld [vmem:[#allocation10 + $0x70] sm:$0xff]
    %v280 = vld [vmem:[#allocation10 + $0x78] sm:$0xff]
    %281 = vmatprep.subr.mxu0 0.0
    %282 = vmatpush1.msra.mxu0 %v280
    %283 = vmatprep.subr.mxu0 0.0
    %284 = vmatpush1.msra.mxu0 %v279
    %285 = vmatprep.subr.mxu0 0.0
    %286 = vmatpush1.msra.mxu0 %v278
    %287 = vmatprep.subr.mxu0 0.0
    %288 = vmatpush1.msra.mxu0 %v277
    %289 = vmatprep.subr.mxu0 0.0
    %290 = vmatpush1.msra.mxu0 %v276
    %291 = vmatprep.subr.mxu0 0.0
    %292 = vmatpush1.msra.mxu0 %v275
    %293 = vmatprep.subr.mxu0 0.0
    %294 = vmatpush1.msra.mxu0 %v274
    %295 = vmatprep.subr.mxu0 0.0
    %296 = vmatpush1.msra.mxu0 %v273
    %297 = vmatprep.subr.mxu0 0.0
    %298 = vmatpush1.msra.mxu0 %v272
    %299 = vmatprep.subr.mxu0 0.0
    %300 = vmatpush1.msra.mxu0 %v271
    %301 = vmatprep.subr.mxu0 0.0
    %302 = vmatpush1.msra.mxu0 %v270
    %303 = vmatprep.subr.mxu0 0.0
    %304 = vmatpush1.msra.mxu0 %v269
    %305 = vmatprep.subr.mxu0 0.0
    %306 = vmatpush1.msra.mxu0 %v268
    %307 = vmatprep.subr.mxu0 0.0
    %308 = vmatpush1.msra.mxu0 %v267
    %309 = vmatprep.subr.mxu0 0.0
    %310 = vmatpush1.msra.mxu0 %v266
    %311 = vmatprep.subr.mxu0 0.0
    %312 = vmatpush1.msra.mxu0 %v265
    %313 = vmatprep.subr.mxu0 0.0
    %314 = vmatpush2.msra.mxu0 0.0
    %315 = vmatprep.subr.mxu0 0.0
    %316 = vmatpush2.msra.mxu0 0.0
    %317 = vmatprep.subr.mxu0 0.0
    %318 = vmatpush2.msra.mxu0 0.0
    %319 = vmatprep.subr.mxu0 0.0
    %320 = vmatpush2.msra.mxu0 0.0
    %321 = vmatprep.subr.mxu0 0.0
    %322 = vmatpush2.msra.mxu0 0.0
    %323 = vmatprep.subr.mxu0 0.0
    %324 = vmatpush2.msra.mxu0 0.0
    %325 = vmatprep.subr.mxu0 0.0
    %326 = vmatpush2.msra.mxu0 0.0
    %327 = vmatprep.subr.mxu0 0.0
    %328 = vmatpush2.msra.mxu0 0.0
    %329 = vmatprep.subr.mxu0 0.0
    %330 = vmatpush2.msra.mxu0 0.0
    %331 = vmatprep.subr.mxu0 0.0
    %332 = vmatpush2.msra.mxu0 0.0
    %333 = vmatprep.subr.mxu0 0.0
    %334 = vmatpush2.msra.mxu0 0.0
    %335 = vmatprep.subr.mxu0 0.0
    %336 = vmatpush2.msra.mxu0 0.0
    %337 = vmatprep.subr.mxu0 0.0
    %338 = vmatpush2.msra.mxu0 0.0
    %339 = vmatprep.subr.mxu0 0.0
    %340 = vmatpush2.msra.mxu0 0.0
    %341 = vmatprep.subr.mxu0 0.0
    %342 = vmatpush2.msra.mxu0 0.0
    %343 = vmatprep.subr.mxu0 0.0
    %344 = vmatpush2.msra.mxu0 0.0
    %345 = vmatprep.mubr.f32.mxu0 0.0
    %346 = vmatmul.mubr.f32.gmra.mxu0 %v88
    %v347 = vpop.f32.mrf.mxu0
    %v348 = vadd.f32 0.0, %v347
    %v349 = vpop.f32.mrf.mxu0
    %350 = vdwg.mxu0
    %v351 = vadd.f32 %v174, %v348
    %352 = vst [vmem:[#allocation12] sm:$0xff] %v351
    // Predicated region
    $region42: #{tpu_custom_call.1} parent=1 // pred_check
      _
    $region43: #{tpu_custom_call.1} parent=1 // pred_check_branch
      %354 = sbr.rel (0) target = $region45
    $region44: #{tpu_custom_call.1} parent=1 // pred_region
      %s356 = ssub.s32 128, 128
      %357 = vsyncadd [#allocation4], %s356
      %s359 = sshll.u32 [#allocation11], 4
      %s360 = int_to_ptr.vmem [resolvable:$true] %s359
      %362 = dma.vmem_to_hbm [thread:$0]  %s360, 128, %s5, [#allocation4]
    $region45: #{tpu_custom_call.1} parent=1 // pred_fallthru
      _
    // Predicated region
    $region46: #{tpu_custom_call.1} parent=1 // pred_check
      _
    $region47: #{tpu_custom_call.1} parent=1 // pred_check_branch
      %364 = sbr.rel (0) target = $region49
    $region48: #{tpu_custom_call.1} parent=1 // pred_region
      %s366 = ssub.s32 128, 128
      %367 = vsyncadd [#allocation13], %s366
      %s369 = sshll.u32 [#allocation12], 4
      %s370 = int_to_ptr.vmem [resolvable:$true] %s369
      %372 = dma.vmem_to_hbm [thread:$0]  %s370, 128, %s6, [#allocation13]
    $region49: #{tpu_custom_call.1} parent=1 // pred_fallthru
      _
    // Predicated region
    $region50: #{tpu_custom_call.1} parent=1 // pred_check
      _
    $region51: #{tpu_custom_call.1} parent=1 // pred_check_branch
      %374 = sbr.rel (0) target = $region53
    $region52: #{tpu_custom_call.1} parent=1 // pred_region
      %375 = dma.done [#allocation4], 128
    $region53: #{tpu_custom_call.1} parent=1 // pred_fallthru
      _
    // Predicated region
    $region54: #{tpu_custom_call.1} parent=1 // pred_check
      _
    $region55: #{tpu_custom_call.1} parent=1 // pred_check_branch
      %377 = sbr.rel (0) target = $region57
    $region56: #{tpu_custom_call.1} parent=1 // pred_region
      %378 = dma.done [#allocation13], 128
    $region57: #{tpu_custom_call.1} parent=1 // pred_fallthru
      _
    %379 = vsyncpa [#allocation3], 1
    %380 = vsyncpa [#allocation6], 1
    %381 = vsyncpa [#allocation9], 1
    %382 = vsyncpa [#allocation4], 1
    %383 = vsyncpa [#allocation13], 1

</llo_original>
